<compile_context>
chip_gen: v5e
topology: v5e:2x2
jax: 0.10.0
libtpu: 0.0.40
codegen_flags: <defaults>
</compile_context>

<pallas_src>
import functools

import jax
import jax.numpy as jnp
from jax.experimental import pallas as pl
from jax.experimental.pallas import tpu as pltpu

_HEAD_W = 128   # lane width of the fused heads output row (one vreg row)
_CHUNK = 8      # timesteps per grid step (one (8,128) heads tile per chunk)


def _round_up(n, m):
    return ((n + m - 1) // m) * m


def _mimicnet_kernel(n_heads, chunk, seq_len, needs_mask,
                     x_ref, state0_ref, w0_ref, wih1_ref, whh1_ref, b_ref,
                     wh_ref, heads_ref, state_ref, s_scr):
    """One chunk of `chunk` LSTM timesteps per grid iteration.

    s_scr carries state across chunks: rows 0..1 = h (layer0, layer1),
    rows 2..3 = c (layer0, layer1).  Within a chunk, state lives in values.
    """
    ci = pl.program_id(0)
    H = whh1_ref.shape[0]
    wdt = w0_ref.dtype

    @pl.when(ci == 0)
    def _():
        s_scr[...] = state0_ref[...]

    # Hoisted loop invariants (JAX does not CSE broadcast_in_dim / slices).
    b0 = b_ref[0:1, :]
    b1 = b_ref[1:2, :]
    bh = b_ref[2:3, 0:_HEAD_W]
    lane = jax.lax.broadcasted_iota(jnp.int32, (1, _HEAD_W), 1)

    h0 = s_scr[0:1, :]
    h1 = s_scr[1:2, :]
    c0 = s_scr[2:3, :]
    c1 = s_scr[3:4, :]

    def l0_dot(xrow, hprev):
        # Fused layer-0 dot over K = pad_in + H:  [x | h_prev] @ [Wih0; Whh0]
        xh = jnp.concatenate([xrow.astype(wdt), hprev.astype(wdt)], axis=-1)
        return jnp.dot(xh, w0_ref[...],
                       preferred_element_type=jnp.float32) + b0

    # Prologue: layer-0 pre-activation for the chunk's first timestep.
    g0 = l0_dot(x_ref[0:1, :], h0)

    heads_rows = []
    for j in range(chunk):
        # Layer-1 recurrent dot first: depends only on carried h1, so the MXU
        # chews on it while the layer-0 sigmoid/tanh phase runs on EUP/VPU.
        g1_rec = jnp.dot(h1.astype(wdt), whh1_ref[...],
                         preferred_element_type=jnp.float32)

        # Layer-0 gates from the pre-activation carried across steps.
        i0 = jax.nn.sigmoid(g0[:, 0 * H:1 * H])
        f0 = jax.nn.sigmoid(g0[:, 1 * H:2 * H])
        gg0 = jnp.tanh(g0[:, 2 * H:3 * H])
        o0 = jax.nn.sigmoid(g0[:, 3 * H:4 * H])
        c0n = f0 * c0 + i0 * gg0
        h0n = o0 * jnp.tanh(c0n)

        # Cross-step pipelining: issue next step's fused layer-0 dot as soon
        # as h0n exists, so it overlaps this step's layer-1 EUP phase.  It
        # only feeds the next iteration, never this one.
        if j + 1 < chunk:
            g0_next = l0_dot(x_ref[j + 1:j + 2, :], h0n)

        # Layer 1 (its recurrent half was already issued above).
        g1 = (jnp.dot(h0n.astype(wdt), wih1_ref[...],
                      preferred_element_type=jnp.float32) + g1_rec + b1)
        i1 = jax.nn.sigmoid(g1[:, 0 * H:1 * H])
        f1 = jax.nn.sigmoid(g1[:, 1 * H:2 * H])
        gg1 = jnp.tanh(g1[:, 2 * H:3 * H])
        o1 = jax.nn.sigmoid(g1[:, 3 * H:4 * H])
        c1n = f1 * c1 + i1 * gg1
        h1n = o1 * jnp.tanh(c1n)

        # Fused output heads: one (1,H)@(H,128) dot into a lane-dense row.
        #   lane 0 = linearL (linear), lane 1 = linearD, lane 2 = linearE.
        hv = (jnp.dot(h1n.astype(wdt), wh_ref[...],
                      preferred_element_type=jnp.float32) + bh)
        sig = jax.nn.sigmoid(hv)
        heads_rows.append(jnp.where(lane == 0, hv,
                                    jnp.where(lane < n_heads, sig,
                                              jnp.zeros_like(hv))))

        # Carry state; steps past seq_len (padded tail) leave it unchanged.
        if needs_mask:
            valid = (ci * chunk + j) < seq_len
            h0 = jnp.where(valid, h0n, h0)
            c0 = jnp.where(valid, c0n, c0)
            h1 = jnp.where(valid, h1n, h1)
            c1 = jnp.where(valid, c1n, c1)
        else:
            h0, c0, h1, c1 = h0n, c0n, h1n, c1n
        if j + 1 < chunk:
            g0 = g0_next

    # One dense (chunk, 128) store per chunk (no per-step masked vst.msk).
    heads_ref[...] = jnp.concatenate(heads_rows, axis=0)

    # Single full-tile state writeback per chunk.
    s_scr[...] = jnp.concatenate([h0, h1, c0, c1], axis=0)

    @pl.when(ci == pl.num_programs(0) - 1)
    def _():
        state_ref[...] = s_scr[...]


@functools.partial(jax.jit, static_argnames=("variant", "param_dtype"))
def mimicnet_lstm_sequence(data_seq, hidden_state, params, *, variant='TCP',
                           param_dtype=jnp.bfloat16):
    """Run T LSTM timesteps in one kernel launch (weights resident in VMEM).

    Returns (heads, (hN, cN)):
      heads: (T, 128) f32, lane0 = l, lane1 = sigmoid(d), lane2 = sigmoid(e)
      hN, cN: (2, H) final hidden / cell state.
    """
    h0, c0 = hidden_state
    T, input_size = data_seq.shape
    H = params['w_hh_l0'].shape[1]
    assert 4 * H >= _HEAD_W, "hidden_size must be >= 32"
    n_heads = 3 if variant == 'DCTCP' else 2
    pad_in = _round_up(input_size, 128)

    chunk = min(_CHUNK, T)
    T_pad = _round_up(T, chunk)
    num_chunks = T_pad // chunk
    needs_mask = (T_pad != T)

    # Lane-padded input rows (zeros beyond input_size / beyond T).
    x = jnp.zeros((T_pad, pad_in), jnp.float32).at[:T, :input_size].set(
        data_seq.astype(jnp.float32))

    # Fused, pre-transposed layer-0 weight: [Wih0 (row-padded); Whh0] -> (pad_in+H, 4H)
    wih0_t = jnp.zeros((pad_in, 4 * H), jnp.float32).at[:input_size, :].set(
        params['w_ih_l0'].T.astype(jnp.float32))
    w0 = jnp.concatenate(
        [wih0_t, params['w_hh_l0'].T.astype(jnp.float32)], axis=0)
    wih1 = params['w_ih_l1'].T.astype(jnp.float32)      # (H, 4H)
    whh1 = params['w_hh_l1'].T.astype(jnp.float32)      # (H, 4H)

    # Folded biases, one dense (3, 4H) tile.
    b = jnp.zeros((3, 4 * H), jnp.float32)
    b = b.at[0, :].set(params['b_ih_l0'] + params['b_hh_l0'])
    b = b.at[1, :].set(params['b_ih_l1'] + params['b_hh_l1'])
    b = b.at[2, 0].set(params['linearL_b'][0])
    b = b.at[2, 1].set(params['linearD_b'][0])
    if n_heads == 3:
        b = b.at[2, 2].set(params['linearE_b'][0])

    # Stacked head weights, pre-transposed & lane-padded: (H, 128).
    wh = jnp.zeros((H, _HEAD_W), jnp.float32)
    wh = wh.at[:, 0].set(params['linearL_w'][0])
    wh = wh.at[:, 1].set(params['linearD_w'][0])
    if n_heads == 3:
        wh = wh.at[:, 2].set(params['linearE_w'][0])

    # Combined state: rows 0..1 = h layers, rows 2..3 = c layers.
    state0 = jnp.concatenate([h0, c0], axis=0).astype(jnp.float32)   # (4, H)

    # bf16 weights by default (MXU-native on v5e/v6e/v7x); gate math stays f32.
    w0 = w0.astype(param_dtype)
    wih1 = wih1.astype(param_dtype)
    whh1 = whh1.astype(param_dtype)
    wh = wh.astype(param_dtype)

    inputs = [x, state0, w0, wih1, whh1, b, wh]

    def const_spec(a):
        nd = a.ndim
        return pl.BlockSpec(a.shape, lambda ci, _nd=nd: (0,) * _nd)

    in_specs = ([pl.BlockSpec((chunk, pad_in), lambda ci: (ci, 0))]
                + [const_spec(a) for a in inputs[1:]])

    out_shape = (jax.ShapeDtypeStruct((T_pad, _HEAD_W), jnp.float32),
                 jax.ShapeDtypeStruct((4, H), jnp.float32))
    out_specs = (pl.BlockSpec((chunk, _HEAD_W), lambda ci: (ci, 0)),
                 pl.BlockSpec((4, H), lambda ci: (0, 0)))

    heads, state = pl.pallas_call(
        functools.partial(_mimicnet_kernel, n_heads, chunk, T, needs_mask),
        grid=(num_chunks,),
        in_specs=in_specs,
        out_specs=out_specs,
        out_shape=out_shape,
        scratch_shapes=[pltpu.VMEM((4, H), jnp.float32)],
        input_output_aliases={1: 1},   # reuse state0's HBM buffer for new state
        compiler_params=pltpu.CompilerParams(
            dimension_semantics=("arbitrary",)),   # sequential recurrence
    )(*inputs)

    return heads[:T], (state[0:2, :], state[2:4, :])


def mimicnet_lstm_forward(data, hidden_state, params, *, variant='TCP',
                          param_dtype=jnp.bfloat16):
    """Equivalent of MimicNetLSTM.forward (single timestep, batch 1)."""
    heads, new_state = mimicnet_lstm_sequence(
        data.reshape(1, -1), hidden_state, params,
        variant=variant, param_dtype=param_dtype)
    l = heads[0:1, 0:1]
    d = heads[0:1, 1:2]
    if variant == 'DCTCP':
        e = heads[0:1, 2:3]
        return (d, l, e), new_state
    return (d, l), new_state


def init_params(key, input_size, hidden_size, variant='TCP'):
    """Deterministic synthetic parameters (PyTorch default-init ranges)."""
    H = hidden_size
    k = 1.0 / (H ** 0.5)
    names_shapes = [
        ('w_ih_l0', (4 * H, input_size)), ('w_hh_l0', (4 * H, H)),
        ('b_ih_l0', (4 * H,)), ('b_hh_l0', (4 * H,)),
        ('w_ih_l1', (4 * H, H)), ('w_hh_l1', (4 * H, H)),
        ('b_ih_l1', (4 * H,)), ('b_hh_l1', (4 * H,)),
        ('linearL_w', (1, H)), ('linearL_b', (1,)),
        ('linearD_w', (1, H)), ('linearD_b', (1,)),
    ]
    if variant == 'DCTCP':
        names_shapes += [('linearE_w', (1, H)), ('linearE_b', (1,))]
    keys = jax.random.split(key, len(names_shapes))
    return {n: jax.random.uniform(kk, s, jnp.float32, -k, k)
            for kk, (n, s) in zip(keys, names_shapes)}


def reference_sequence(data_seq, hidden_state, params, variant='TCP'):
    """Pure-JAX reference matching PyTorch nn.LSTM + heads semantics."""
    h, c = hidden_state
    HP = jax.lax.Precision.HIGHEST

    def mm(a, b):
        return jnp.dot(a, b, precision=HP)

    def cell(x, h, c, wih, whh, bih, bhh):
        g = mm(x, wih.T) + bih + mm(h, whh.T) + bhh
        i, f, gg, o = jnp.split(g, 4, axis=-1)
        i, f, o = jax.nn.sigmoid(i), jax.nn.sigmoid(f), jax.nn.sigmoid(o)
        gg = jnp.tanh(gg)
        cn = f * c + i * gg
        return o * jnp.tanh(cn), cn

    outs = []
    for t in range(data_seq.shape[0]):
        x = data_seq[t:t + 1].astype(jnp.float32)
        h0n, c0n = cell(x, h[0:1], c[0:1], params['w_ih_l0'],
                        params['w_hh_l0'], params['b_ih_l0'], params['b_hh_l0'])
        h1n, c1n = cell(h0n, h[1:2], c[1:2], params['w_ih_l1'],
                        params['w_hh_l1'], params['b_ih_l1'], params['b_hh_l1'])
        h = jnp.concatenate([h0n, h1n], 0)
        c = jnp.concatenate([c0n, c1n], 0)
        X = h1n
        l = (mm(X, params['linearL_w'].T) + params['linearL_b'])[0, 0]
        d = jax.nn.sigmoid(mm(X, params['linearD_w'].T)
                           + params['linearD_b'])[0, 0]
        row = [l, d]
        if variant == 'DCTCP':
            e = jax.nn.sigmoid(mm(X, params['linearE_w'].T)
                               + params['linearE_b'])[0, 0]
            row.append(e)
        outs.append(jnp.stack(row))
    return jnp.stack(outs), (h, c)


if __name__ == "__main__":
    input_size = 16
    window_size = 8
    hidden_size = input_size * window_size      # 128
    num_layers = 2

    key = jax.random.PRNGKey(0)
    k1, k2, k3, k4 = jax.random.split(key, 4)

    h0 = jnp.zeros((num_layers, hidden_size), jnp.float32)
    c0 = jnp.zeros((num_layers, hidden_size), jnp.float32)

    # --- 1) single-step forward (exact module semantics), TCP, f32 weights ---
    params = init_params(k1, input_size, hidden_size, 'TCP')
    data = jax.random.normal(k2, (input_size,), dtype=jnp.float32)
    (d_out, l_out), (hN, cN) = mimicnet_lstm_forward(
        data, (h0, c0), params, variant='TCP', param_dtype=jnp.float32)
    jax.block_until_ready((d_out, l_out, hN, cN))

    ref_heads, (hR, cR) = reference_sequence(
        data.reshape(1, -1), (h0, c0), params, 'TCP')
    assert jnp.allclose(l_out, ref_heads[0, 0], atol=5e-3)
    assert jnp.allclose(d_out, ref_heads[0, 1], atol=5e-3)
    assert jnp.allclose(hN, hR, atol=5e-3)
    assert jnp.allclose(cN, cR, atol=5e-3)

    # --- 2) multi-step sequence (T not a multiple of the chunk), DCTCP, f32 ---
    T = 12
    params_d = init_params(k3, input_size, hidden_size, 'DCTCP')
    seq = jax.random.normal(k4, (T, input_size), dtype=jnp.float32)
    heads, (hN, cN) = mimicnet_lstm_sequence(
        seq, (h0, c0), params_d, variant='DCTCP', param_dtype=jnp.float32)
    jax.block_until_ready((heads, hN, cN))

    ref_heads, (hR, cR) = reference_sequence(seq, (h0, c0), params_d, 'DCTCP')
    assert jnp.allclose(heads[:, :3], ref_heads, atol=5e-3)
    assert jnp.allclose(hN, hR, atol=5e-3)
    assert jnp.allclose(cN, cR, atol=5e-3)

    # --- 3) default bf16 weights (MXU-native path), loose tolerance ---
    heads_bf, (hNb, cNb) = mimicnet_lstm_sequence(
        seq, (h0, c0), params_d, variant='DCTCP')
    jax.block_until_ready((heads_bf, hNb, cNb))
    assert jnp.allclose(heads_bf[:, :3], ref_heads, atol=5e-2)
    assert jnp.allclose(hNb, hR, atol=5e-2)
    assert jnp.allclose(cNb, cR, atol=5e-2)

    print("KERNEL_OK")
</pallas_src>

<mosaic_0001>
module attributes {stable_mosaic.version = 11 : i64} {
  func.func @_mimicnet_kernel(%arg0: i32, %arg1: memref<1x128xf32, #tpu.memory_space<vmem>>, %arg2: memref<4x128xf32, #tpu.memory_space<vmem>>, %arg3: memref<256x512xf32, #tpu.memory_space<vmem>>, %arg4: memref<128x512xf32, #tpu.memory_space<vmem>>, %arg5: memref<128x512xf32, #tpu.memory_space<vmem>>, %arg6: memref<3x512xf32, #tpu.memory_space<vmem>>, %arg7: memref<128x128xf32, #tpu.memory_space<vmem>>, %arg8: memref<1x128xf32, #tpu.memory_space<vmem>>, %arg9: memref<4x128xf32, #tpu.memory_space<vmem>>, %arg10: memref<4x128xf32, #tpu.memory_space<vmem>>) attributes {dimension_semantics = [#tpu.dimension_semantics<arbitrary>], iteration_bounds = array<i64: 1>, scalar_prefetch = 0 : i64, scratch_operands = 1 : i64, tpu.core_type = #tpu.core_type<tc>, window_params = [{transform_indices = @transform_0, window_bounds = array<i64: 1, 128>}, {pipeline_mode = #tpu.pipeline_mode<synchronous>, transform_indices = @transform_1, window_bounds = array<i64: 4, 128>}, {pipeline_mode = #tpu.pipeline_mode<synchronous>, transform_indices = @transform_2, window_bounds = array<i64: 256, 512>}, {pipeline_mode = #tpu.pipeline_mode<synchronous>, transform_indices = @transform_3, window_bounds = array<i64: 128, 512>}, {pipeline_mode = #tpu.pipeline_mode<synchronous>, transform_indices = @transform_4, window_bounds = array<i64: 128, 512>}, {pipeline_mode = #tpu.pipeline_mode<synchronous>, transform_indices = @transform_5, window_bounds = array<i64: 3, 512>}, {pipeline_mode = #tpu.pipeline_mode<synchronous>, transform_indices = @transform_6, window_bounds = array<i64: 128, 128>}, {transform_indices = @transform_7, window_bounds = array<i64: 1, 128>}, {pipeline_mode = #tpu.pipeline_mode<synchronous>, transform_indices = @transform_8, window_bounds = array<i64: 4, 128>}]} {
    %c0_i32 = arith.constant 0 : i32
    %0 = arith.cmpi eq, %arg0, %c0_i32 : i32
    %1 = arith.extui %0 : i1 to i32
    %c0_i32_0 = arith.constant 0 : i32
    %2 = arith.cmpi ne, %1, %c0_i32_0 : i32
    scf.if %2 {
      %c0_39 = arith.constant 0 : index
      %c0_40 = arith.constant 0 : index
      %93 = vector.load %arg2[%c0_39, %c0_40] : memref<4x128xf32, #tpu.memory_space<vmem>>, vector<4x128xf32>
      %c0_41 = arith.constant 0 : index
      %c0_42 = arith.constant 0 : index
      %94 = vector.load %arg10[%c0_41, %c0_42] : memref<4x128xf32, #tpu.memory_space<vmem>>, vector<4x128xf32>
      tpu.vector_store %arg10[%c0_41, %c0_42], %93 {strides = array<i32>} : memref<4x128xf32, #tpu.memory_space<vmem>>, vector<4x128xf32>,
    } else {
    }
    %c0 = arith.constant 0 : index
    %c0_1 = arith.constant 0 : index
    %3 = vector.load %arg6[%c0, %c0_1] : memref<3x512xf32, #tpu.memory_space<vmem>>, vector<1x512xf32>
    %c1 = arith.constant 1 : index
    %c0_2 = arith.constant 0 : index
    %4 = vector.load %arg6[%c1, %c0_2] : memref<3x512xf32, #tpu.memory_space<vmem>>, vector<1x512xf32>
    %c2 = arith.constant 2 : index
    %c0_3 = arith.constant 0 : index
    %5 = vector.load %arg6[%c2, %c0_3] : memref<3x512xf32, #tpu.memory_space<vmem>>, vector<1x128xf32>
    %6 = tpu.iota {dimensions = array<i32: 1>} : vector<1x128xi32>
    %c0_4 = arith.constant 0 : index
    %c0_5 = arith.constant 0 : index
    %7 = vector.load %arg10[%c0_4, %c0_5] : memref<4x128xf32, #tpu.memory_space<vmem>>, vector<1x128xf32>
    %c1_6 = arith.constant 1 : index
    %c0_7 = arith.constant 0 : index
    %8 = vector.load %arg10[%c1_6, %c0_7] : memref<4x128xf32, #tpu.memory_space<vmem>>, vector<1x128xf32>
    %c2_8 = arith.constant 2 : index
    %c0_9 = arith.constant 0 : index
    %9 = vector.load %arg10[%c2_8, %c0_9] : memref<4x128xf32, #tpu.memory_space<vmem>>, vector<1x128xf32>
    %c3 = arith.constant 3 : index
    %c0_10 = arith.constant 0 : index
    %10 = vector.load %arg10[%c3, %c0_10] : memref<4x128xf32, #tpu.memory_space<vmem>>, vector<1x128xf32>
    %c0_11 = arith.constant 0 : index
    %c0_12 = arith.constant 0 : index
    %11 = vector.load %arg1[%c0_11, %c0_12] : memref<1x128xf32, #tpu.memory_space<vmem>>, vector<1x128xf32>
    %12 = tpu.concatenate %11, %7 in 1 : vector<1x128xf32>, vector<1x128xf32> -> vector<1x256xf32>
    %c0_13 = arith.constant 0 : index
    %c0_14 = arith.constant 0 : index
    %13 = vector.load %arg3[%c0_13, %c0_14] : memref<256x512xf32, #tpu.memory_space<vmem>>, vector<256x512xf32>
    %cst = arith.constant dense<0.000000e+00> : vector<1x512xf32>
    %14 = tpu.matmul %12, %13, %cst {dimension_numbers = #tpu.dot_dimension_numbers<[1], [0], [0], [1], [0, 0, 1, 1], [], []>} : vector<1x256xf32>, vector<256x512xf32>, vector<1x512xf32> -> vector<1x512xf32>
    %15 = arith.addf %14, %3 : vector<1x512xf32>
    %c0_15 = arith.constant 0 : index
    %c0_16 = arith.constant 0 : index
    %16 = vector.load %arg5[%c0_15, %c0_16] : memref<128x512xf32, #tpu.memory_space<vmem>>, vector<128x512xf32>
    %cst_17 = arith.constant dense<0.000000e+00> : vector<1x512xf32>
    %17 = tpu.matmul %8, %16, %cst_17 {dimension_numbers = #tpu.dot_dimension_numbers<[1], [0], [0], [1], [0, 0, 1, 1], [], []>} : vector<1x128xf32>, vector<128x512xf32>, vector<1x512xf32> -> vector<1x512xf32>
    %18 = vector.extract_strided_slice %15 {offsets = [0, 0], sizes = [1, 128], strides = [1, 1]} : vector<1x512xf32> to vector<1x128xf32>
    %19 = arith.negf %18 : vector<1x128xf32>
    %20 = math.exp %19 : vector<1x128xf32>
    %cst_18 = arith.constant 1.000000e+00 : f32
    %21 = vector.broadcast %cst_18 : f32 to vector<1x128xf32>
    %22 = arith.addf %21, %20 : vector<1x128xf32>
    %23 = arith.divf %21, %22 : vector<1x128xf32>
    %24 = vector.extract_strided_slice %15 {offsets = [0, 128], sizes = [1, 128], strides = [1, 1]} : vector<1x512xf32> to vector<1x128xf32>
    %25 = arith.negf %24 : vector<1x128xf32>
    %26 = math.exp %25 : vector<1x128xf32>
    %cst_19 = arith.constant 1.000000e+00 : f32
    %27 = vector.broadcast %cst_19 : f32 to vector<1x128xf32>
    %28 = arith.addf %27, %26 : vector<1x128xf32>
    %29 = arith.divf %27, %28 : vector<1x128xf32>
    %30 = vector.extract_strided_slice %15 {offsets = [0, 256], sizes = [1, 128], strides = [1, 1]} : vector<1x512xf32> to vector<1x128xf32>
    %31 = math.tanh %30 : vector<1x128xf32>
    %32 = vector.extract_strided_slice %15 {offsets = [0, 384], sizes = [1, 128], strides = [1, 1]} : vector<1x512xf32> to vector<1x128xf32>
    %33 = arith.negf %32 : vector<1x128xf32>
    %34 = math.exp %33 : vector<1x128xf32>
    %cst_20 = arith.constant 1.000000e+00 : f32
    %35 = vector.broadcast %cst_20 : f32 to vector<1x128xf32>
    %36 = arith.addf %35, %34 : vector<1x128xf32>
    %37 = arith.divf %35, %36 : vector<1x128xf32>
    %38 = arith.mulf %29, %9 : vector<1x128xf32>
    %39 = arith.mulf %23, %31 : vector<1x128xf32>
    %40 = arith.addf %38, %39 : vector<1x128xf32>
    %41 = math.tanh %40 : vector<1x128xf32>
    %42 = arith.mulf %37, %41 : vector<1x128xf32>
    %c0_21 = arith.constant 0 : index
    %c0_22 = arith.constant 0 : index
    %43 = vector.load %arg4[%c0_21, %c0_22] : memref<128x512xf32, #tpu.memory_space<vmem>>, vector<128x512xf32>
    %cst_23 = arith.constant dense<0.000000e+00> : vector<1x512xf32>
    %44 = tpu.matmul %42, %43, %cst_23 {dimension_numbers = #tpu.dot_dimension_numbers<[1], [0], [0], [1], [0, 0, 1, 1], [], []>} : vector<1x128xf32>, vector<128x512xf32>, vector<1x512xf32> -> vector<1x512xf32>
    %45 = arith.addf %44, %17 : vector<1x512xf32>
    %46 = arith.addf %45, %4 : vector<1x512xf32>
    %47 = vector.extract_strided_slice %46 {offsets = [0, 0], sizes = [1, 128], strides = [1, 1]} : vector<1x512xf32> to vector<1x128xf32>
    %48 = arith.negf %47 : vector<1x128xf32>
    %49 = math.exp %48 : vector<1x128xf32>
    %cst_24 = arith.constant 1.000000e+00 : f32
    %50 = vector.broadcast %cst_24 : f32 to vector<1x128xf32>
    %51 = arith.addf %50, %49 : vector<1x128xf32>
    %52 = arith.divf %50, %51 : vector<1x128xf32>
    %53 = vector.extract_strided_slice %46 {offsets = [0, 128], sizes = [1, 128], strides = [1, 1]} : vector<1x512xf32> to vector<1x128xf32>
    %54 = arith.negf %53 : vector<1x128xf32>
    %55 = math.exp %54 : vector<1x128xf32>
    %cst_25 = arith.constant 1.000000e+00 : f32
    %56 = vector.broadcast %cst_25 : f32 to vector<1x128xf32>
    %57 = arith.addf %56, %55 : vector<1x128xf32>
    %58 = arith.divf %56, %57 : vector<1x128xf32>
    %59 = vector.extract_strided_slice %46 {offsets = [0, 256], sizes = [1, 128], strides = [1, 1]} : vector<1x512xf32> to vector<1x128xf32>
    %60 = math.tanh %59 : vector<1x128xf32>
    %61 = vector.extract_strided_slice %46 {offsets = [0, 384], sizes = [1, 128], strides = [1, 1]} : vector<1x512xf32> to vector<1x128xf32>
    %62 = arith.negf %61 : vector<1x128xf32>
    %63 = math.exp %62 : vector<1x128xf32>
    %cst_26 = arith.constant 1.000000e+00 : f32
    %64 = vector.broadcast %cst_26 : f32 to vector<1x128xf32>
    %65 = arith.addf %64, %63 : vector<1x128xf32>
    %66 = arith.divf %64, %65 : vector<1x128xf32>
    %67 = arith.mulf %58, %10 : vector<1x128xf32>
    %68 = arith.mulf %52, %60 : vector<1x128xf32>
    %69 = arith.addf %67, %68 : vector<1x128xf32>
    %70 = math.tanh %69 : vector<1x128xf32>
    %71 = arith.mulf %66, %70 : vector<1x128xf32>
    %c0_27 = arith.constant 0 : index
    %c0_28 = arith.constant 0 : index
    %72 = vector.load %arg7[%c0_27, %c0_28] : memref<128x128xf32, #tpu.memory_space<vmem>>, vector<128x128xf32>
    %cst_29 = arith.constant dense<0.000000e+00> : vector<1x128xf32>
    %73 = tpu.matmul %71, %72, %cst_29 {dimension_numbers = #tpu.dot_dimension_numbers<[1], [0], [0], [1], [0, 0, 1, 1], [], []>} : vector<1x128xf32>, vector<128x128xf32>, vector<1x128xf32> -> vector<1x128xf32>
    %74 = arith.addf %73, %5 : vector<1x128xf32>
    %75 = arith.negf %74 : vector<1x128xf32>
    %76 = math.exp %75 : vector<1x128xf32>
    %cst_30 = arith.constant 1.000000e+00 : f32
    %77 = vector.broadcast %cst_30 : f32 to vector<1x128xf32>
    %78 = arith.addf %77, %76 : vector<1x128xf32>
    %79 = arith.divf %77, %78 : vector<1x128xf32>
    %c0_i32_31 = arith.constant 0 : i32
    %80 = vector.broadcast %c0_i32_31 : i32 to vector<1x128xi32>
    %81 = arith.cmpi eq, %6, %80 : vector<1x128xi32>
    %c2_i32 = arith.constant 2 : i32
    %82 = vector.broadcast %c2_i32 : i32 to vector<1x128xi32>
    %83 = arith.cmpi slt, %6, %82 : vector<1x128xi32>
    %cst_32 = arith.constant 0.000000e+00 : f32
    %84 = vector.broadcast %cst_32 : f32 to vector<1x128xf32>
    %85 = arith.select %83, %79, %84 : vector<1x128xi1>, vector<1x128xf32>
    %86 = arith.select %81, %74, %85 : vector<1x128xi1>, vector<1x128xf32>
    %c0_33 = arith.constant 0 : index
    %c0_34 = arith.constant 0 : index
    %87 = vector.load %arg8[%c0_33, %c0_34] : memref<1x128xf32, #tpu.memory_space<vmem>>, vector<1x128xf32>
    tpu.vector_store %arg8[%c0_33, %c0_34], %86 {strides = array<i32>} : memref<1x128xf32, #tpu.memory_space<vmem>>, vector<1x128xf32>,
    %88 = tpu.concatenate %42, %71, %40, %69 in 0 : vector<1x128xf32>, vector<1x128xf32>, vector<1x128xf32>, vector<1x128xf32> -> vector<4x128xf32>
    %c0_35 = arith.constant 0 : index
    %c0_36 = arith.constant 0 : index
    %89 = vector.load %arg10[%c0_35, %c0_36] : memref<4x128xf32, #tpu.memory_space<vmem>>, vector<4x128xf32>
    tpu.vector_store %arg10[%c0_35, %c0_36], %88 {strides = array<i32>} : memref<4x128xf32, #tpu.memory_space<vmem>>, vector<4x128xf32>,
    %c0_i32_37 = arith.constant 0 : i32
    %90 = arith.cmpi eq, %arg0, %c0_i32_37 : i32
    %91 = arith.extui %90 : i1 to i32
    %c0_i32_38 = arith.constant 0 : i32
    %92 = arith.cmpi ne, %91, %c0_i32_38 : i32
    scf.if %92 {
      %c0_39 = arith.constant 0 : index
      %c0_40 = arith.constant 0 : index
      %93 = vector.load %arg10[%c0_39, %c0_40] : memref<4x128xf32, #tpu.memory_space<vmem>>, vector<4x128xf32>
      %c0_41 = arith.constant 0 : index
      %c0_42 = arith.constant 0 : index
      %94 = vector.load %arg9[%c0_41, %c0_42] : memref<4x128xf32, #tpu.memory_space<vmem>>, vector<4x128xf32>
      tpu.vector_store %arg9[%c0_41, %c0_42], %93 {strides = array<i32>} : memref<4x128xf32, #tpu.memory_space<vmem>>, vector<4x128xf32>,
    } else {
    }
    return
  }
  func.func @transform_0(%arg0: i32) -> (i32, i32) {
    %c0_i32 = arith.constant 0 : i32
    %c0_i32_0 = arith.constant 0 : i32
    return %arg0, %c0_i32 : i32, i32
  }
  func.func @transform_1(%arg0: i32) -> (i32, i32) {
    %c0_i32 = arith.constant 0 : i32
    %c0_i32_0 = arith.constant 0 : i32
    %c0_i32_1 = arith.constant 0 : i32
    return %c0_i32, %c0_i32_0 : i32, i32
  }
  func.func @transform_2(%arg0: i32) -> (i32, i32) {
    %c0_i32 = arith.constant 0 : i32
    %c0_i32_0 = arith.constant 0 : i32
    %c0_i32_1 = arith.constant 0 : i32
    return %c0_i32, %c0_i32_0 : i32, i32
  }
  func.func @transform_3(%arg0: i32) -> (i32, i32) {
    %c0_i32 = arith.constant 0 : i32
    %c0_i32_0 = arith.constant 0 : i32
    %c0_i32_1 = arith.constant 0 : i32
    return %c0_i32, %c0_i32_0 : i32, i32
  }
  func.func @transform_4(%arg0: i32) -> (i32, i32) {
    %c0_i32 = arith.constant 0 : i32
    %c0_i32_0 = arith.constant 0 : i32
    %c0_i32_1 = arith.constant 0 : i32
    return %c0_i32, %c0_i32_0 : i32, i32
  }
  func.func @transform_5(%arg0: i32) -> (i32, i32) {
    %c0_i32 = arith.constant 0 : i32
    %c0_i32_0 = arith.constant 0 : i32
    %c0_i32_1 = arith.constant 0 : i32
    return %c0_i32, %c0_i32_0 : i32, i32
  }
  func.func @transform_6(%arg0: i32) -> (i32, i32) {
    %c0_i32 = arith.constant 0 : i32
    %c0_i32_0 = arith.constant 0 : i32
    %c0_i32_1 = arith.constant 0 : i32
    return %c0_i32, %c0_i32_0 : i32, i32
  }
  func.func @transform_7(%arg0: i32) -> (i32, i32) {
    %c0_i32 = arith.constant 0 : i32
    %c0_i32_0 = arith.constant 0 : i32
    return %arg0, %c0_i32 : i32, i32
  }
  func.func @transform_8(%arg0: i32) -> (i32, i32) {
    %c0_i32 = arith.constant 0 : i32
    %c0_i32_0 = arith.constant 0 : i32
    %c0_i32_1 = arith.constant 0 : i32
    return %c0_i32, %c0_i32_0 : i32, i32
  }
}

</mosaic_0001>

<llo_original>
// kernel: mimicnet_lstm_sequence.1
$region0: #{mimicnet_lstm_sequence.1}
  #allocation0 [shape = 'u32[]', space=smem, size = 0x4, offset = 0x4, fixed_abs, tag = 'smem constant byte address 0x4 - core index']
  #allocation1 [shape = 'u32[72,128]{1,0:T(1,128)}', space=vmem, size = 0x9000, scoped, tag = 'internal scratch']
  #allocation2 [shape = 'f32[4,128]{1,0:T(4,128)}', space=vmem, size = 0x800, scoped, tag = 'scratch operand']
  %s0 = inlined_call_operand.vmem [shape: f32[1,128], index: 0, kind: input, shape index: {}]
  %s1 = inlined_call_operand.vmem [shape: f32[4,128], index: 1, kind: input, shape index: {}, may-alias: {1,8}]
  %s2 = inlined_call_operand.vmem [shape: f32[256,512], index: 2, kind: input, shape index: {}]
  %s3 = inlined_call_operand.vmem [shape: f32[128,512], index: 3, kind: input, shape index: {}]
  %s4 = inlined_call_operand.vmem [shape: f32[128,512], index: 4, kind: input, shape index: {}]
  %s5 = inlined_call_operand.vmem [shape: f32[3,512], index: 5, kind: input, shape index: {}]
  %s6 = inlined_call_operand.vmem [shape: f32[128,128], index: 6, kind: input, shape index: {}]
  %s7 = inlined_call_operand.hbm [shape: f32[1,128], index: 7, kind: output, shape index: {0}]
  %s8 = inlined_call_operand.vmem [shape: f32[4,128], index: 8, kind: output, shape index: {1}, may-alias: {1,8}]
  %9 = xla_tuple %s7, %s8
  %s10 = sld [smem:[#allocation0]]
  $region54: #{mimicnet_lstm_sequence.1} parent=0
    _
  %s12 = ssub.s32 1, %s10
  %s13 = scalar_select 0, %s12, %s10
  $region1: #{mimicnet_lstm_sequence.1} parent=0
    #allocation3 [shape = 'u8[512]{0}', space=vmem, size = 0x400, scoped, tag = 'output window, operand 0, single buffered']
    #allocation4 [shape = 's32[1]{0}', space=sflag, size = 0x4, scoped, tag = 'scoped memory for mimicnet_lstm_sequence.1']
    %14 = vsyncpa [#allocation4], 0
    // Predicated region
    $region2: #{mimicnet_lstm_sequence.1} parent=1 // pred_check
      _
    $region3: #{mimicnet_lstm_sequence.1} parent=1 // pred_check_branch
      %16 = sbr.rel (0) target = $region5
    $region4: #{mimicnet_lstm_sequence.1} parent=1 // pred_region
      _
    $region5: #{mimicnet_lstm_sequence.1} parent=1 // pred_fallthru
      _
    // Predicated region
    $region6: #{mimicnet_lstm_sequence.1} parent=1 // pred_check
      _
    $region7: #{mimicnet_lstm_sequence.1} parent=1 // pred_check_branch
      %18 = sbr.rel (0) target = $region9
    $region8: #{mimicnet_lstm_sequence.1} parent=1 // pred_region
      _
    $region9: #{mimicnet_lstm_sequence.1} parent=1 // pred_fallthru
      _
    // Predicated region
    $region10: #{mimicnet_lstm_sequence.1} parent=1 // pred_check
      _
    $region11: #{mimicnet_lstm_sequence.1} parent=1 // pred_check_branch
      %20 = sbr.rel (0) target = $region13
    $region12: #{mimicnet_lstm_sequence.1} parent=1 // pred_region
      _
    $region13: #{mimicnet_lstm_sequence.1} parent=1 // pred_fallthru
      _
    // Predicated region
    $region14: #{mimicnet_lstm_sequence.1} parent=1 // pred_check
      _
    $region15: #{mimicnet_lstm_sequence.1} parent=1 // pred_check_branch
      %22 = sbr.rel (0) target = $region17
    $region16: #{mimicnet_lstm_sequence.1} parent=1 // pred_region
      _
    $region17: #{mimicnet_lstm_sequence.1} parent=1 // pred_fallthru
      _
    // Predicated region
    $region18: #{mimicnet_lstm_sequence.1} parent=1 // pred_check
      _
    $region19: #{mimicnet_lstm_sequence.1} parent=1 // pred_check_branch
      %24 = sbr.rel (0) target = $region21
    $region20: #{mimicnet_lstm_sequence.1} parent=1 // pred_region
      _
    $region21: #{mimicnet_lstm_sequence.1} parent=1 // pred_fallthru
      _
    // Predicated region
    $region22: #{mimicnet_lstm_sequence.1} parent=1 // pred_check
      _
    $region23: #{mimicnet_lstm_sequence.1} parent=1 // pred_check_branch
      %26 = sbr.rel (0) target = $region25
    $region24: #{mimicnet_lstm_sequence.1} parent=1 // pred_region
      _
    $region25: #{mimicnet_lstm_sequence.1} parent=1 // pred_fallthru
      _
    // Predicated region
    $region26: #{mimicnet_lstm_sequence.1} parent=1 // pred_check
      _
    $region27: #{mimicnet_lstm_sequence.1} parent=1 // pred_check_branch
      %28 = sbr.rel (0) target = $region29
    $region28: #{mimicnet_lstm_sequence.1} parent=1 // pred_region
      _
    $region29: #{mimicnet_lstm_sequence.1} parent=1 // pred_fallthru
      _
    %p29 = scmp.eq.s32.totalorder 0, 0
    // Predicated region
    $region30: #{mimicnet_lstm_sequence.1} parent=1 // pred_check
      %p30 = pneg %p29
    $region31: #{mimicnet_lstm_sequence.1} parent=1 // pred_check_branch
      %32 = sbr.rel (%p30) target = $region33
    $region32: #{mimicnet_lstm_sequence.1} parent=1 // pred_region
      %v33 = vld [vmem:[%s1] sm:$0xf]
      %34 = vst [vmem:[#allocation2] sm:$0xf] %v33
    $region33: #{mimicnet_lstm_sequence.1} parent=1 // pred_fallthru
      _
    %v35 = vld [vmem:[%s5] ss:$4 sm:$0xf]
    %s36 = scalar_lea.vmem %s5, 1
    %v37 = vld [vmem:[%s36] ss:$4 sm:$0xf]
    %v38 = vld [vmem:[%s5 + $0x2] sm:$0x1]
    %v39 = vlaneseq
    %v40 = vand.u32 %v39, 127
    %v41 = vld [vmem:[#allocation2] sm:$0x1]
    %v42 = vld [vmem:[#allocation2 + $0x1] sm:$0x1]
    %v43 = vld [vmem:[#allocation2 + $0x2] sm:$0x1]
    %v44 = vld [vmem:[#allocation2 + $0x3] sm:$0x1]
    %v45 = vld [vmem:[%s0] sm:$0x1]
    %v46 = vld [vmem:[%s2] sm:$0xff]
    %v47 = vld [vmem:[%s2 + $0x8] sm:$0xff]
    %v48 = vld [vmem:[%s2 + $0x10] sm:$0xff]
    %v49 = vld [vmem:[%s2 + $0x18] sm:$0xff]
    %v50 = vld [vmem:[%s2 + $0x20] sm:$0xff]
    %v51 = vld [vmem:[%s2 + $0x28] sm:$0xff]
    %v52 = vld [vmem:[%s2 + $0x30] sm:$0xff]
    %v53 = vld [vmem:[%s2 + $0x38] sm:$0xff]
    %v54 = vld [vmem:[%s2 + $0x40] sm:$0xff]
    %v55 = vld [vmem:[%s2 + $0x48] sm:$0xff]
    %v56 = vld [vmem:[%s2 + $0x50] sm:$0xff]
    %v57 = vld [vmem:[%s2 + $0x58] sm:$0xff]
    %v58 = vld [vmem:[%s2 + $0x60] sm:$0xff]
    %v59 = vld [vmem:[%s2 + $0x68] sm:$0xff]
    %v60 = vld [vmem:[%s2 + $0x70] sm:$0xff]
    %v61 = vld [vmem:[%s2 + $0x78] sm:$0xff]
    %v62 = vld [vmem:[%s2 + $0x80] sm:$0xff]
    %v63 = vld [vmem:[%s2 + $0x88] sm:$0xff]
    %v64 = vld [vmem:[%s2 + $0x90] sm:$0xff]
    %v65 = vld [vmem:[%s2 + $0x98] sm:$0xff]
    %v66 = vld [vmem:[%s2 + $0xa0] sm:$0xff]
    %v67 = vld [vmem:[%s2 + $0xa8] sm:$0xff]
    %v68 = vld [vmem:[%s2 + $0xb0] sm:$0xff]
    %v69 = vld [vmem:[%s2 + $0xb8] sm:$0xff]
    %v70 = vld [vmem:[%s2 + $0xc0] sm:$0xff]
    %v71 = vld [vmem:[%s2 + $0xc8] sm:$0xff]
    %v72 = vld [vmem:[%s2 + $0xd0] sm:$0xff]
    %v73 = vld [vmem:[%s2 + $0xd8] sm:$0xff]
    %v74 = vld [vmem:[%s2 + $0xe0] sm:$0xff]
    %v75 = vld [vmem:[%s2 + $0xe8] sm:$0xff]
    %v76 = vld [vmem:[%s2 + $0xf0] sm:$0xff]
    %v77 = vld [vmem:[%s2 + $0xf8] sm:$0xff]
    %v78 = vld [vmem:[%s2 + $0x100] sm:$0xff]
    %v79 = vld [vmem:[%s2 + $0x108] sm:$0xff]
    %v80 = vld [vmem:[%s2 + $0x110] sm:$0xff]
    %v81 = vld [vmem:[%s2 + $0x118] sm:$0xff]
    %v82 = vld [vmem:[%s2 + $0x120] sm:$0xff]
    %v83 = vld [vmem:[%s2 + $0x128] sm:$0xff]
    %v84 = vld [vmem:[%s2 + $0x130] sm:$0xff]
    %v85 = vld [vmem:[%s2 + $0x138] sm:$0xff]
    %v86 = vld [vmem:[%s2 + $0x140] sm:$0xff]
    %v87 = vld [vmem:[%s2 + $0x148] sm:$0xff]
    %v88 = vld [vmem:[%s2 + $0x150] sm:$0xff]
    %v89 = vld [vmem:[%s2 + $0x158] sm:$0xff]
    %v90 = vld [vmem:[%s2 + $0x160] sm:$0xff]
    %v91 = vld [vmem:[%s2 + $0x168] sm:$0xff]
    %v92 = vld [vmem:[%s2 + $0x170] sm:$0xff]
    %v93 = vld [vmem:[%s2 + $0x178] sm:$0xff]
    %v94 = vld [vmem:[%s2 + $0x180] sm:$0xff]
    %v95 = vld [vmem:[%s2 + $0x188] sm:$0xff]
    %v96 = vld [vmem:[%s2 + $0x190] sm:$0xff]
    %v97 = vld [vmem:[%s2 + $0x198] sm:$0xff]
    %v98 = vld [vmem:[%s2 + $0x1a0] sm:$0xff]
    %v99 = vld [vmem:[%s2 + $0x1a8] sm:$0xff]
    %v100 = vld [vmem:[%s2 + $0x1b0] sm:$0xff]
    %v101 = vld [vmem:[%s2 + $0x1b8] sm:$0xff]
    %v102 = vld [vmem:[%s2 + $0x1c0] sm:$0xff]
    %v103 = vld [vmem:[%s2 + $0x1c8] sm:$0xff]
    %v104 = vld [vmem:[%s2 + $0x1d0] sm:$0xff]
    %v105 = vld [vmem:[%s2 + $0x1d8] sm:$0xff]
    %v106 = vld [vmem:[%s2 + $0x1e0] sm:$0xff]
    %v107 = vld [vmem:[%s2 + $0x1e8] sm:$0xff]
    %v108 = vld [vmem:[%s2 + $0x1f0] sm:$0xff]
    %v109 = vld [vmem:[%s2 + $0x1f8] sm:$0xff]
    %v110 = vld [vmem:[%s2 + $0x200] sm:$0xff]
    %v111 = vld [vmem:[%s2 + $0x208] sm:$0xff]
    %v112 = vld [vmem:[%s2 + $0x210] sm:$0xff]
    %v113 = vld [vmem:[%s2 + $0x218] sm:$0xff]
    %v114 = vld [vmem:[%s2 + $0x220] sm:$0xff]
    %v115 = vld [vmem:[%s2 + $0x228] sm:$0xff]
    %v116 = vld [vmem:[%s2 + $0x230] sm:$0xff]
    %v117 = vld [vmem:[%s2 + $0x238] sm:$0xff]
    %v118 = vld [vmem:[%s2 + $0x240] sm:$0xff]
    %v119 = vld [vmem:[%s2 + $0x248] sm:$0xff]
    %v120 = vld [vmem:[%s2 + $0x250] sm:$0xff]
    %v121 = vld [vmem:[%s2 + $0x258] sm:$0xff]
    %v122 = vld [vmem:[%s2 + $0x260] sm:$0xff]
    %v123 = vld [vmem:[%s2 + $0x268] sm:$0xff]
    %v124 = vld [vmem:[%s2 + $0x270] sm:$0xff]
    %v125 = vld [vmem:[%s2 + $0x278] sm:$0xff]
    %v126 = vld [vmem:[%s2 + $0x280] sm:$0xff]
    %v127 = vld [vmem:[%s2 + $0x288] sm:$0xff]
    %v128 = vld [vmem:[%s2 + $0x290] sm:$0xff]
    %v129 = vld [vmem:[%s2 + $0x298] sm:$0xff]
    %v130 = vld [vmem:[%s2 + $0x2a0] sm:$0xff]
    %v131 = vld [vmem:[%s2 + $0x2a8] sm:$0xff]
    %v132 = vld [vmem:[%s2 + $0x2b0] sm:$0xff]
    %v133 = vld [vmem:[%s2 + $0x2b8] sm:$0xff]
    %v134 = vld [vmem:[%s2 + $0x2c0] sm:$0xff]
    %v135 = vld [vmem:[%s2 + $0x2c8] sm:$0xff]
    %v136 = vld [vmem:[%s2 + $0x2d0] sm:$0xff]
    %v137 = vld [vmem:[%s2 + $0x2d8] sm:$0xff]
    %v138 = vld [vmem:[%s2 + $0x2e0] sm:$0xff]
    %v139 = vld [vmem:[%s2 + $0x2e8] sm:$0xff]
    %v140 = vld [vmem:[%s2 + $0x2f0] sm:$0xff]
    %v141 = vld [vmem:[%s2 + $0x2f8] sm:$0xff]
    %v142 = vld [vmem:[%s2 + $0x300] sm:$0xff]
    %v143 = vld [vmem:[%s2 + $0x308] sm:$0xff]
    %v144 = vld [vmem:[%s2 + $0x310] sm:$0xff]
    %v145 = vld [vmem:[%s2 + $0x318] sm:$0xff]
    %v146 = vld [vmem:[%s2 + $0x320] sm:$0xff]
    %v147 = vld [vmem:[%s2 + $0x328] sm:$0xff]
    %v148 = vld [vmem:[%s2 + $0x330] sm:$0xff]
    %v149 = vld [vmem:[%s2 + $0x338] sm:$0xff]
    %v150 = vld [vmem:[%s2 + $0x340] sm:$0xff]
    %v151 = vld [vmem:[%s2 + $0x348] sm:$0xff]
    %v152 = vld [vmem:[%s2 + $0x350] sm:$0xff]
    %v153 = vld [vmem:[%s2 + $0x358] sm:$0xff]
    %v154 = vld [vmem:[%s2 + $0x360] sm:$0xff]
    %v155 = vld [vmem:[%s2 + $0x368] sm:$0xff]
    %v156 = vld [vmem:[%s2 + $0x370] sm:$0xff]
    %v157 = vld [vmem:[%s2 + $0x378] sm:$0xff]
    %v158 = vld [vmem:[%s2 + $0x380] sm:$0xff]
    %v159 = vld [vmem:[%s2 + $0x388] sm:$0xff]
    %v160 = vld [vmem:[%s2 + $0x390] sm:$0xff]
    %v161 = vld [vmem:[%s2 + $0x398] sm:$0xff]
    %v162 = vld [vmem:[%s2 + $0x3a0] sm:$0xff]
    %v163 = vld [vmem:[%s2 + $0x3a8] sm:$0xff]
    %v164 = vld [vmem:[%s2 + $0x3b0] sm:$0xff]
    %v165 = vld [vmem:[%s2 + $0x3b8] sm:$0xff]
    %v166 = vld [vmem:[%s2 + $0x3c0] sm:$0xff]
    %v167 = vld [vmem:[%s2 + $0x3c8] sm:$0xff]
    %v168 = vld [vmem:[%s2 + $0x3d0] sm:$0xff]
    %v169 = vld [vmem:[%s2 + $0x3d8] sm:$0xff]
    %v170 = vld [vmem:[%s2 + $0x3e0] sm:$0xff]
    %v171 = vld [vmem:[%s2 + $0x3e8] sm:$0xff]
    %v172 = vld [vmem:[%s2 + $0x3f0] sm:$0xff]
    %v173 = vld [vmem:[%s2 + $0x3f8] sm:$0xff]
    %v175 = vperm.slane %v35, 0
    %v176 = vperm.slane %v35, 1
    %v177 = vperm.slane %v35, 2
    %v178 = vperm.slane %v35, 3
    %183 = vmatpush.msra.mxu0 %v106
    %184 = vmatpush.msra.mxu0 %v102
    %185 = vmatpush.msra.mxu0 %v98
    %186 = vmatpush.msra.mxu0 %v94
    %187 = vmatpush.msra.mxu0 %v90
    %188 = vmatpush.msra.mxu0 %v86
    %189 = vmatpush.msra.mxu0 %v82
    %190 = vmatpush.msra.mxu0 %v78
    %191 = vmatpush.msra.mxu0 %v74
    %192 = vmatpush.msra.mxu0 %v70
    %193 = vmatpush.msra.mxu0 %v66
    %194 = vmatpush.msra.mxu0 %v62
    %195 = vmatpush.msra.mxu0 %v58
    %196 = vmatpush.msra.mxu0 %v54
    %197 = vmatpush.msra.mxu0 %v50
    %198 = vmatpush.msra.mxu0 %v46
    %199 = vmatmul.f32.gmra.mxu0 %v45
    %v200 = vpop.f32.mrf.mxu0
    %v201 = vadd.f32 %v175, %v200
    %202 = vdwg.mxu0
    %203 = vmatpush.msra.mxu0 %v170
    %204 = vmatpush.msra.mxu0 %v166
    %205 = vmatpush.msra.mxu0 %v162
    %206 = vmatpush.msra.mxu0 %v158
    %207 = vmatpush.msra.mxu0 %v154
    %208 = vmatpush.msra.mxu0 %v150
    %209 = vmatpush.msra.mxu0 %v146
    %210 = vmatpush.msra.mxu0 %v142
    %211 = vmatpush.msra.mxu0 %v138
    %212 = vmatpush.msra.mxu0 %v134
    %213 = vmatpush.msra.mxu0 %v130
    %214 = vmatpush.msra.mxu0 %v126
    %215 = vmatpush.msra.mxu0 %v122
    %216 = vmatpush.msra.mxu0 %v118
    %217 = vmatpush.msra.mxu0 %v114
    %218 = vmatpush.msra.mxu0 %v110
    %219 = vmatmul.f32.gmra.mxu0 %v41
    %v220 = vpop.f32.mrf.mxu0
    %v221 = vadd.f32 %v201, %v220
    %222 = vdwg.mxu0
    %223 = vmatpush.msra.mxu0 %v107
    %224 = vmatpush.msra.mxu0 %v103
    %225 = vmatpush.msra.mxu0 %v99
    %226 = vmatpush.msra.mxu0 %v95
    %227 = vmatpush.msra.mxu0 %v91
    %228 = vmatpush.msra.mxu0 %v87
    %229 = vmatpush.msra.mxu0 %v83
    %230 = vmatpush.msra.mxu0 %v79
    %231 = vmatpush.msra.mxu0 %v75
    %232 = vmatpush.msra.mxu0 %v71
    %233 = vmatpush.msra.mxu0 %v67
    %234 = vmatpush.msra.mxu0 %v63
    %235 = vmatpush.msra.mxu0 %v59
    %236 = vmatpush.msra.mxu0 %v55
    %237 = vmatpush.msra.mxu0 %v51
    %238 = vmatpush.msra.mxu0 %v47
    %239 = vmatmul.f32.gmra.mxu0 %v45
    %v240 = vpop.f32.mrf.mxu0
    %v241 = vadd.f32 %v176, %v240
    %242 = vdwg.mxu0
    %243 = vmatpush.msra.mxu0 %v171
    %244 = vmatpush.msra.mxu0 %v167
    %245 = vmatpush.msra.mxu0 %v163
    %246 = vmatpush.msra.mxu0 %v159
    %247 = vmatpush.msra.mxu0 %v155
    %248 = vmatpush.msra.mxu0 %v151
    %249 = vmatpush.msra.mxu0 %v147
    %250 = vmatpush.msra.mxu0 %v143
    %251 = vmatpush.msra.mxu0 %v139
    %252 = vmatpush.msra.mxu0 %v135
    %253 = vmatpush.msra.mxu0 %v131
    %254 = vmatpush.msra.mxu0 %v127
    %255 = vmatpush.msra.mxu0 %v123
    %256 = vmatpush.msra.mxu0 %v119
    %257 = vmatpush.msra.mxu0 %v115
    %258 = vmatpush.msra.mxu0 %v111
    %259 = vmatmul.f32.gmra.mxu0 %v41
    %v260 = vpop.f32.mrf.mxu0
    %v261 = vadd.f32 %v241, %v260
    %262 = vdwg.mxu0
    %263 = vmatpush.msra.mxu0 %v108
    %264 = vmatpush.msra.mxu0 %v104
    %265 = vmatpush.msra.mxu0 %v100
    %266 = vmatpush.msra.mxu0 %v96
    %267 = vmatpush.msra.mxu0 %v92
    %268 = vmatpush.msra.mxu0 %v88
    %269 = vmatpush.msra.mxu0 %v84
    %270 = vmatpush.msra.mxu0 %v80
    %271 = vmatpush.msra.mxu0 %v76
    %272 = vmatpush.msra.mxu0 %v72
    %273 = vmatpush.msra.mxu0 %v68
    %274 = vmatpush.msra.mxu0 %v64
    %275 = vmatpush.msra.mxu0 %v60
    %276 = vmatpush.msra.mxu0 %v56
    %277 = vmatpush.msra.mxu0 %v52
    %278 = vmatpush.msra.mxu0 %v48
    %279 = vmatmul.f32.gmra.mxu0 %v45
    %v280 = vpop.f32.mrf.mxu0
    %v281 = vadd.f32 %v177, %v280
    %282 = vdwg.mxu0
    %283 = vmatpush.msra.mxu0 %v172
    %284 = vmatpush.msra.mxu0 %v168
    %285 = vmatpush.msra.mxu0 %v164
    %286 = vmatpush.msra.mxu0 %v160
    %287 = vmatpush.msra.mxu0 %v156
    %288 = vmatpush.msra.mxu0 %v152
    %289 = vmatpush.msra.mxu0 %v148
    %290 = vmatpush.msra.mxu0 %v144
    %291 = vmatpush.msra.mxu0 %v140
    %292 = vmatpush.msra.mxu0 %v136
    %293 = vmatpush.msra.mxu0 %v132
    %294 = vmatpush.msra.mxu0 %v128
    %295 = vmatpush.msra.mxu0 %v124
    %296 = vmatpush.msra.mxu0 %v120
    %297 = vmatpush.msra.mxu0 %v116
    %298 = vmatpush.msra.mxu0 %v112
    %299 = vmatmul.f32.gmra.mxu0 %v41
    %v300 = vpop.f32.mrf.mxu0
    %v301 = vadd.f32 %v281, %v300
    %302 = vdwg.mxu0
    %303 = vmatpush.msra.mxu0 %v109
    %304 = vmatpush.msra.mxu0 %v105
    %305 = vmatpush.msra.mxu0 %v101
    %306 = vmatpush.msra.mxu0 %v97
    %307 = vmatpush.msra.mxu0 %v93
    %308 = vmatpush.msra.mxu0 %v89
    %309 = vmatpush.msra.mxu0 %v85
    %310 = vmatpush.msra.mxu0 %v81
    %311 = vmatpush.msra.mxu0 %v77
    %312 = vmatpush.msra.mxu0 %v73
    %313 = vmatpush.msra.mxu0 %v69
    %314 = vmatpush.msra.mxu0 %v65
    %315 = vmatpush.msra.mxu0 %v61
    %316 = vmatpush.msra.mxu0 %v57
    %317 = vmatpush.msra.mxu0 %v53
    %318 = vmatpush.msra.mxu0 %v49
    %319 = vmatmul.f32.gmra.mxu0 %v45
    %v320 = vpop.f32.mrf.mxu0
    %v321 = vadd.f32 %v178, %v320
    %322 = vdwg.mxu0
    %323 = vmatpush.msra.mxu0 %v173
    %324 = vmatpush.msra.mxu0 %v169
    %325 = vmatpush.msra.mxu0 %v165
    %326 = vmatpush.msra.mxu0 %v161
    %327 = vmatpush.msra.mxu0 %v157
    %328 = vmatpush.msra.mxu0 %v153
    %329 = vmatpush.msra.mxu0 %v149
    %330 = vmatpush.msra.mxu0 %v145
    %331 = vmatpush.msra.mxu0 %v141
    %332 = vmatpush.msra.mxu0 %v137
    %333 = vmatpush.msra.mxu0 %v133
    %334 = vmatpush.msra.mxu0 %v129
    %335 = vmatpush.msra.mxu0 %v125
    %336 = vmatpush.msra.mxu0 %v121
    %337 = vmatpush.msra.mxu0 %v117
    %338 = vmatpush.msra.mxu0 %v113
    %339 = vmatmul.f32.gmra.mxu0 %v41
    %v340 = vpop.f32.mrf.mxu0
    %v341 = vadd.f32 %v321, %v340
    %342 = vdwg.mxu0
    %v343 = vld [vmem:[%s4] sm:$0xff]
    %v344 = vld [vmem:[%s4 + $0x8] sm:$0xff]
    %v345 = vld [vmem:[%s4 + $0x10] sm:$0xff]
    %v346 = vld [vmem:[%s4 + $0x18] sm:$0xff]
    %v347 = vld [vmem:[%s4 + $0x20] sm:$0xff]
    %v348 = vld [vmem:[%s4 + $0x28] sm:$0xff]
    %v349 = vld [vmem:[%s4 + $0x30] sm:$0xff]
    %v350 = vld [vmem:[%s4 + $0x38] sm:$0xff]
    %v351 = vld [vmem:[%s4 + $0x40] sm:$0xff]
    %v352 = vld [vmem:[%s4 + $0x48] sm:$0xff]
    %v353 = vld [vmem:[%s4 + $0x50] sm:$0xff]
    %v354 = vld [vmem:[%s4 + $0x58] sm:$0xff]
    %v355 = vld [vmem:[%s4 + $0x60] sm:$0xff]
    %v356 = vld [vmem:[%s4 + $0x68] sm:$0xff]
    %v357 = vld [vmem:[%s4 + $0x70] sm:$0xff]
    %v358 = vld [vmem:[%s4 + $0x78] sm:$0xff]
    %v359 = vld [vmem:[%s4 + $0x80] sm:$0xff]
    %v360 = vld [vmem:[%s4 + $0x88] sm:$0xff]
    %v361 = vld [vmem:[%s4 + $0x90] sm:$0xff]
    %v362 = vld [vmem:[%s4 + $0x98] sm:$0xff]
    %v363 = vld [vmem:[%s4 + $0xa0] sm:$0xff]
    %v364 = vld [vmem:[%s4 + $0xa8] sm:$0xff]
    %v365 = vld [vmem:[%s4 + $0xb0] sm:$0xff]
    %v366 = vld [vmem:[%s4 + $0xb8] sm:$0xff]
    %v367 = vld [vmem:[%s4 + $0xc0] sm:$0xff]
    %v368 = vld [vmem:[%s4 + $0xc8] sm:$0xff]
    %v369 = vld [vmem:[%s4 + $0xd0] sm:$0xff]
    %v370 = vld [vmem:[%s4 + $0xd8] sm:$0xff]
    %v371 = vld [vmem:[%s4 + $0xe0] sm:$0xff]
    %v372 = vld [vmem:[%s4 + $0xe8] sm:$0xff]
    %v373 = vld [vmem:[%s4 + $0xf0] sm:$0xff]
    %v374 = vld [vmem:[%s4 + $0xf8] sm:$0xff]
    %v375 = vld [vmem:[%s4 + $0x100] sm:$0xff]
    %v376 = vld [vmem:[%s4 + $0x108] sm:$0xff]
    %v377 = vld [vmem:[%s4 + $0x110] sm:$0xff]
    %v378 = vld [vmem:[%s4 + $0x118] sm:$0xff]
    %v379 = vld [vmem:[%s4 + $0x120] sm:$0xff]
    %v380 = vld [vmem:[%s4 + $0x128] sm:$0xff]
    %v381 = vld [vmem:[%s4 + $0x130] sm:$0xff]
    %v382 = vld [vmem:[%s4 + $0x138] sm:$0xff]
    %v383 = vld [vmem:[%s4 + $0x140] sm:$0xff]
    %v384 = vld [vmem:[%s4 + $0x148] sm:$0xff]
    %v385 = vld [vmem:[%s4 + $0x150] sm:$0xff]
    %v386 = vld [vmem:[%s4 + $0x158] sm:$0xff]
    %v387 = vld [vmem:[%s4 + $0x160] sm:$0xff]
    %v388 = vld [vmem:[%s4 + $0x168] sm:$0xff]
    %v389 = vld [vmem:[%s4 + $0x170] sm:$0xff]
    %v390 = vld [vmem:[%s4 + $0x178] sm:$0xff]
    %v391 = vld [vmem:[%s4 + $0x180] sm:$0xff]
    %v392 = vld [vmem:[%s4 + $0x188] sm:$0xff]
    %v393 = vld [vmem:[%s4 + $0x190] sm:$0xff]
    %v394 = vld [vmem:[%s4 + $0x198] sm:$0xff]
    %v395 = vld [vmem:[%s4 + $0x1a0] sm:$0xff]
    %v396 = vld [vmem:[%s4 + $0x1a8] sm:$0xff]
    %v397 = vld [vmem:[%s4 + $0x1b0] sm:$0xff]
    %v398 = vld [vmem:[%s4 + $0x1b8] sm:$0xff]
    %v399 = vld [vmem:[%s4 + $0x1c0] sm:$0xff]
    %v400 = vld [vmem:[%s4 + $0x1c8] sm:$0xff]
    %v401 = vld [vmem:[%s4 + $0x1d0] sm:$0xff]
    %v402 = vld [vmem:[%s4 + $0x1d8] sm:$0xff]
    %v403 = vld [vmem:[%s4 + $0x1e0] sm:$0xff]
    %v404 = vld [vmem:[%s4 + $0x1e8] sm:$0xff]
    %v405 = vld [vmem:[%s4 + $0x1f0] sm:$0xff]
    %v406 = vld [vmem:[%s4 + $0x1f8] sm:$0xff]
    %407 = vmatpush.msra.mxu0 %v403
    %408 = vmatpush.msra.mxu0 %v399
    %409 = vmatpush.msra.mxu0 %v395
    %410 = vmatpush.msra.mxu0 %v391
    %411 = vmatpush.msra.mxu0 %v387
    %412 = vmatpush.msra.mxu0 %v383
    %413 = vmatpush.msra.mxu0 %v379
    %414 = vmatpush.msra.mxu0 %v375
    %415 = vmatpush.msra.mxu0 %v371
    %416 = vmatpush.msra.mxu0 %v367
    %417 = vmatpush.msra.mxu0 %v363
    %418 = vmatpush.msra.mxu0 %v359
    %419 = vmatpush.msra.mxu0 %v355
    %420 = vmatpush.msra.mxu0 %v351
    %421 = vmatpush.msra.mxu0 %v347
    %422 = vmatpush.msra.mxu0 %v343
    %423 = vmatmul.f32.gmra.mxu0 %v42
    %v424 = vpop.f32.mrf.mxu0
    %v425 = vadd.f32 0.0, %v424
    %426 = vdwg.mxu0
    %427 = vmatpush.msra.mxu0 %v404
    %428 = vmatpush.msra.mxu0 %v400
    %429 = vmatpush.msra.mxu0 %v396
    %430 = vmatpush.msra.mxu0 %v392
    %431 = vmatpush.msra.mxu0 %v388
    %432 = vmatpush.msra.mxu0 %v384
    %433 = vmatpush.msra.mxu0 %v380
    %434 = vmatpush.msra.mxu0 %v376
    %435 = vmatpush.msra.mxu0 %v372
    %436 = vmatpush.msra.mxu0 %v368
    %437 = vmatpush.msra.mxu0 %v364
    %438 = vmatpush.msra.mxu0 %v360
    %439 = vmatpush.msra.mxu0 %v356
    %440 = vmatpush.msra.mxu0 %v352
    %441 = vmatpush.msra.mxu0 %v348
    %442 = vmatpush.msra.mxu0 %v344
    %443 = vmatmul.f32.gmra.mxu0 %v42
    %v444 = vpop.f32.mrf.mxu0
    %v445 = vadd.f32 0.0, %v444
    %446 = vdwg.mxu0
    %447 = vmatpush.msra.mxu0 %v405
    %448 = vmatpush.msra.mxu0 %v401
    %449 = vmatpush.msra.mxu0 %v397
    %450 = vmatpush.msra.mxu0 %v393
    %451 = vmatpush.msra.mxu0 %v389
    %452 = vmatpush.msra.mxu0 %v385
    %453 = vmatpush.msra.mxu0 %v381
    %454 = vmatpush.msra.mxu0 %v377
    %455 = vmatpush.msra.mxu0 %v373
    %456 = vmatpush.msra.mxu0 %v369
    %457 = vmatpush.msra.mxu0 %v365
    %458 = vmatpush.msra.mxu0 %v361
    %459 = vmatpush.msra.mxu0 %v357
    %460 = vmatpush.msra.mxu0 %v353
    %461 = vmatpush.msra.mxu0 %v349
    %462 = vmatpush.msra.mxu0 %v345
    %463 = vmatmul.f32.gmra.mxu0 %v42
    %v464 = vpop.f32.mrf.mxu0
    %v465 = vadd.f32 0.0, %v464
    %466 = vdwg.mxu0
    %467 = vmatpush.msra.mxu0 %v406
    %468 = vmatpush.msra.mxu0 %v402
    %469 = vmatpush.msra.mxu0 %v398
    %470 = vmatpush.msra.mxu0 %v394
    %471 = vmatpush.msra.mxu0 %v390
    %472 = vmatpush.msra.mxu0 %v386
    %473 = vmatpush.msra.mxu0 %v382
    %474 = vmatpush.msra.mxu0 %v378
    %475 = vmatpush.msra.mxu0 %v374
    %476 = vmatpush.msra.mxu0 %v370
    %477 = vmatpush.msra.mxu0 %v366
    %478 = vmatpush.msra.mxu0 %v362
    %479 = vmatpush.msra.mxu0 %v358
    %480 = vmatpush.msra.mxu0 %v354
    %481 = vmatpush.msra.mxu0 %v350
    %482 = vmatpush.msra.mxu0 %v346
    %483 = vmatmul.f32.gmra.mxu0 %v42
    %v484 = vpop.f32.mrf.mxu0
    %v485 = vadd.f32 0.0, %v484
    %486 = vdwg.mxu0
    %v487 = vxor.u32 %v221, 2147483648
    %v488 = vmul.f32 %v487, 1.442695
    %v489 = vpow.pop %v488
    %v490 = vadd.f32 %v489, 1.0
    %v491 = vrcp.pop %v490
    %v492 = vmul.f32 %v490, %v491
    %v493 = vsub.f32 1.0, %v492
    %v494 = vmul.f32 %v491, %v493
    %v495 = vadd.f32 %v491, %v494
    %vm496 = vweird.f32 %v490
    %vm497 = vweird.f32 %v491
    %vm498 = vmor %vm496, %vm497
    %v499 = vsel %vm498, %v491, %v495
    %v500 = vand.u32 2147483647, %v490
    %vm501 = vcmp.eq.f32.partialorder %v500, 8.507059e+37
    %v502 = vand.u32 %v490, 2147483648
    %v503 = vor.u32 1.1754944e-38, %v502
    %v504 = vsel %vm501, %v503, %v499
    %v505 = vmul.f32 1.0, %v504
    %v506 = vxor.u32 %v261, 2147483648
    %v507 = vmul.f32 %v506, 1.442695
    %v508 = vpow.pop %v507
    %v509 = vadd.f32 %v508, 1.0
    %v510 = vrcp.pop %v509
    %v511 = vmul.f32 %v509, %v510
    %v512 = vsub.f32 1.0, %v511
    %v513 = vmul.f32 %v510, %v512
    %v514 = vadd.f32 %v510, %v513
    %vm515 = vweird.f32 %v509
    %vm516 = vweird.f32 %v510
    %vm517 = vmor %vm515, %vm516
    %v518 = vsel %vm517, %v510, %v514
    %v519 = vand.u32 2147483647, %v509
    %vm520 = vcmp.eq.f32.partialorder %v519, 8.507059e+37
    %v521 = vand.u32 %v509, 2147483648
    %v522 = vor.u32 1.1754944e-38, %v521
    %v523 = vsel %vm520, %v522, %v518
    %v524 = vmul.f32 1.0, %v523
    %v525 = vtanh.pop %v301
    %v526 = vxor.u32 %v341, 2147483648
    %v527 = vmul.f32 %v526, 1.442695
    %v528 = vpow.pop %v527
    %v529 = vadd.f32 %v528, 1.0
    %v530 = vrcp.pop %v529
    %v531 = vmul.f32 %v529, %v530
    %v532 = vsub.f32 1.0, %v531
    %v533 = vmul.f32 %v530, %v532
    %v534 = vadd.f32 %v530, %v533
    %vm535 = vweird.f32 %v529
    %vm536 = vweird.f32 %v530
    %vm537 = vmor %vm535, %vm536
    %v538 = vsel %vm537, %v530, %v534
    %v539 = vand.u32 2147483647, %v529
    %vm540 = vcmp.eq.f32.partialorder %v539, 8.507059e+37
    %v541 = vand.u32 %v529, 2147483648
    %v542 = vor.u32 1.1754944e-38, %v541
    %v543 = vsel %vm540, %v542, %v538
    %v544 = vmul.f32 1.0, %v543
    %v545 = vmul.f32 %v524, %v43
    %v546 = vmul.f32 %v505, %v525
    %v547 = vadd.f32 %v545, %v546
    %v548 = vtanh.pop %v547
    %v549 = vmul.f32 %v544, %v548
    %v550 = vld [vmem:[%s3] sm:$0xff]
    %v551 = vld [vmem:[%s3 + $0x8] sm:$0xff]
    %v552 = vld [vmem:[%s3 + $0x10] sm:$0xff]
    %v553 = vld [vmem:[%s3 + $0x18] sm:$0xff]
    %v554 = vld [vmem:[%s3 + $0x20] sm:$0xff]
    %v555 = vld [vmem:[%s3 + $0x28] sm:$0xff]
    %v556 = vld [vmem:[%s3 + $0x30] sm:$0xff]
    %v557 = vld [vmem:[%s3 + $0x38] sm:$0xff]
    %v558 = vld [vmem:[%s3 + $0x40] sm:$0xff]
    %v559 = vld [vmem:[%s3 + $0x48] sm:$0xff]
    %v560 = vld [vmem:[%s3 + $0x50] sm:$0xff]
    %v561 = vld [vmem:[%s3 + $0x58] sm:$0xff]
    %v562 = vld [vmem:[%s3 + $0x60] sm:$0xff]
    %v563 = vld [vmem:[%s3 + $0x68] sm:$0xff]
    %v564 = vld [vmem:[%s3 + $0x70] sm:$0xff]
    %v565 = vld [vmem:[%s3 + $0x78] sm:$0xff]
    %v566 = vld [vmem:[%s3 + $0x80] sm:$0xff]
    %v567 = vld [vmem:[%s3 + $0x88] sm:$0xff]
    %v568 = vld [vmem:[%s3 + $0x90] sm:$0xff]
    %v569 = vld [vmem:[%s3 + $0x98] sm:$0xff]
    %v570 = vld [vmem:[%s3 + $0xa0] sm:$0xff]
    %v571 = vld [vmem:[%s3 + $0xa8] sm:$0xff]
    %v572 = vld [vmem:[%s3 + $0xb0] sm:$0xff]
    %v573 = vld [vmem:[%s3 + $0xb8] sm:$0xff]
    %v574 = vld [vmem:[%s3 + $0xc0] sm:$0xff]
    %v575 = vld [vmem:[%s3 + $0xc8] sm:$0xff]
    %v576 = vld [vmem:[%s3 + $0xd0] sm:$0xff]
    %v577 = vld [vmem:[%s3 + $0xd8] sm:$0xff]
    %v578 = vld [vmem:[%s3 + $0xe0] sm:$0xff]
    %v579 = vld [vmem:[%s3 + $0xe8] sm:$0xff]
    %v580 = vld [vmem:[%s3 + $0xf0] sm:$0xff]
    %v581 = vld [vmem:[%s3 + $0xf8] sm:$0xff]
    %v582 = vld [vmem:[%s3 + $0x100] sm:$0xff]
    %v583 = vld [vmem:[%s3 + $0x108] sm:$0xff]
    %v584 = vld [vmem:[%s3 + $0x110] sm:$0xff]
    %v585 = vld [vmem:[%s3 + $0x118] sm:$0xff]
    %v586 = vld [vmem:[%s3 + $0x120] sm:$0xff]
    %v587 = vld [vmem:[%s3 + $0x128] sm:$0xff]
    %v588 = vld [vmem:[%s3 + $0x130] sm:$0xff]
    %v589 = vld [vmem:[%s3 + $0x138] sm:$0xff]
    %v590 = vld [vmem:[%s3 + $0x140] sm:$0xff]
    %v591 = vld [vmem:[%s3 + $0x148] sm:$0xff]
    %v592 = vld [vmem:[%s3 + $0x150] sm:$0xff]
    %v593 = vld [vmem:[%s3 + $0x158] sm:$0xff]
    %v594 = vld [vmem:[%s3 + $0x160] sm:$0xff]
    %v595 = vld [vmem:[%s3 + $0x168] sm:$0xff]
    %v596 = vld [vmem:[%s3 + $0x170] sm:$0xff]
    %v597 = vld [vmem:[%s3 + $0x178] sm:$0xff]
    %v598 = vld [vmem:[%s3 + $0x180] sm:$0xff]
    %v599 = vld [vmem:[%s3 + $0x188] sm:$0xff]
    %v600 = vld [vmem:[%s3 + $0x190] sm:$0xff]
    %v601 = vld [vmem:[%s3 + $0x198] sm:$0xff]
    %v602 = vld [vmem:[%s3 + $0x1a0] sm:$0xff]
    %v603 = vld [vmem:[%s3 + $0x1a8] sm:$0xff]
    %v604 = vld [vmem:[%s3 + $0x1b0] sm:$0xff]
    %v605 = vld [vmem:[%s3 + $0x1b8] sm:$0xff]
    %v606 = vld [vmem:[%s3 + $0x1c0] sm:$0xff]
    %v607 = vld [vmem:[%s3 + $0x1c8] sm:$0xff]
    %v608 = vld [vmem:[%s3 + $0x1d0] sm:$0xff]
    %v609 = vld [vmem:[%s3 + $0x1d8] sm:$0xff]
    %v610 = vld [vmem:[%s3 + $0x1e0] sm:$0xff]
    %v611 = vld [vmem:[%s3 + $0x1e8] sm:$0xff]
    %v612 = vld [vmem:[%s3 + $0x1f0] sm:$0xff]
    %v613 = vld [vmem:[%s3 + $0x1f8] sm:$0xff]
    %614 = vmatpush.msra.mxu0 %v610
    %615 = vmatpush.msra.mxu0 %v606
    %616 = vmatpush.msra.mxu0 %v602
    %617 = vmatpush.msra.mxu0 %v598
    %618 = vmatpush.msra.mxu0 %v594
    %619 = vmatpush.msra.mxu0 %v590
    %620 = vmatpush.msra.mxu0 %v586
    %621 = vmatpush.msra.mxu0 %v582
    %622 = vmatpush.msra.mxu0 %v578
    %623 = vmatpush.msra.mxu0 %v574
    %624 = vmatpush.msra.mxu0 %v570
    %625 = vmatpush.msra.mxu0 %v566
    %626 = vmatpush.msra.mxu0 %v562
    %627 = vmatpush.msra.mxu0 %v558
    %628 = vmatpush.msra.mxu0 %v554
    %629 = vmatpush.msra.mxu0 %v550
    %630 = vmatmul.f32.gmra.mxu0 %v549
    %v631 = vpop.f32.mrf.mxu0
    %v632 = vadd.f32 %v425, %v631
    %633 = vdwg.mxu0
    %634 = vmatpush.msra.mxu0 %v611
    %635 = vmatpush.msra.mxu0 %v607
    %636 = vmatpush.msra.mxu0 %v603
    %637 = vmatpush.msra.mxu0 %v599
    %638 = vmatpush.msra.mxu0 %v595
    %639 = vmatpush.msra.mxu0 %v591
    %640 = vmatpush.msra.mxu0 %v587
    %641 = vmatpush.msra.mxu0 %v583
    %642 = vmatpush.msra.mxu0 %v579
    %643 = vmatpush.msra.mxu0 %v575
    %644 = vmatpush.msra.mxu0 %v571
    %645 = vmatpush.msra.mxu0 %v567
    %646 = vmatpush.msra.mxu0 %v563
    %647 = vmatpush.msra.mxu0 %v559
    %648 = vmatpush.msra.mxu0 %v555
    %649 = vmatpush.msra.mxu0 %v551
    %650 = vmatmul.f32.gmra.mxu0 %v549
    %v651 = vpop.f32.mrf.mxu0
    %v652 = vadd.f32 %v445, %v651
    %653 = vdwg.mxu0
    %654 = vmatpush.msra.mxu0 %v612
    %655 = vmatpush.msra.mxu0 %v608
    %656 = vmatpush.msra.mxu0 %v604
    %657 = vmatpush.msra.mxu0 %v600
    %658 = vmatpush.msra.mxu0 %v596
    %659 = vmatpush.msra.mxu0 %v592
    %660 = vmatpush.msra.mxu0 %v588
    %661 = vmatpush.msra.mxu0 %v584
    %662 = vmatpush.msra.mxu0 %v580
    %663 = vmatpush.msra.mxu0 %v576
    %664 = vmatpush.msra.mxu0 %v572
    %665 = vmatpush.msra.mxu0 %v568
    %666 = vmatpush.msra.mxu0 %v564
    %667 = vmatpush.msra.mxu0 %v560
    %668 = vmatpush.msra.mxu0 %v556
    %669 = vmatpush.msra.mxu0 %v552
    %670 = vmatmul.f32.gmra.mxu0 %v549
    %v671 = vpop.f32.mrf.mxu0
    %v672 = vadd.f32 %v465, %v671
    %673 = vdwg.mxu0
    %674 = vmatpush.msra.mxu0 %v613
    %675 = vmatpush.msra.mxu0 %v609
    %676 = vmatpush.msra.mxu0 %v605
    %677 = vmatpush.msra.mxu0 %v601
    %678 = vmatpush.msra.mxu0 %v597
    %679 = vmatpush.msra.mxu0 %v593
    %680 = vmatpush.msra.mxu0 %v589
    %681 = vmatpush.msra.mxu0 %v585
    %682 = vmatpush.msra.mxu0 %v581
    %683 = vmatpush.msra.mxu0 %v577
    %684 = vmatpush.msra.mxu0 %v573
    %685 = vmatpush.msra.mxu0 %v569
    %686 = vmatpush.msra.mxu0 %v565
    %687 = vmatpush.msra.mxu0 %v561
    %688 = vmatpush.msra.mxu0 %v557
    %689 = vmatpush.msra.mxu0 %v553
    %690 = vmatmul.f32.gmra.mxu0 %v549
    %v691 = vpop.f32.mrf.mxu0
    %v692 = vadd.f32 %v485, %v691
    %693 = vdwg.mxu0
    %v695 = vperm.slane %v37, 0
    %v696 = vperm.slane %v37, 1
    %v697 = vperm.slane %v37, 2
    %v698 = vperm.slane %v37, 3
    %v703 = vadd.f32 %v632, %v695
    %v704 = vadd.f32 %v652, %v696
    %v705 = vadd.f32 %v672, %v697
    %v706 = vadd.f32 %v692, %v698
    %v707 = vxor.u32 %v703, 2147483648
    %v708 = vmul.f32 %v707, 1.442695
    %v709 = vpow.pop %v708
    %v710 = vadd.f32 %v709, 1.0
    %v711 = vrcp.pop %v710
    %v712 = vmul.f32 %v710, %v711
    %v713 = vsub.f32 1.0, %v712
    %v714 = vmul.f32 %v711, %v713
    %v715 = vadd.f32 %v711, %v714
    %vm716 = vweird.f32 %v710
    %vm717 = vweird.f32 %v711
    %vm718 = vmor %vm716, %vm717
    %v719 = vsel %vm718, %v711, %v715
    %v720 = vand.u32 2147483647, %v710
    %vm721 = vcmp.eq.f32.partialorder %v720, 8.507059e+37
    %v722 = vand.u32 %v710, 2147483648
    %v723 = vor.u32 1.1754944e-38, %v722
    %v724 = vsel %vm721, %v723, %v719
    %v725 = vmul.f32 1.0, %v724
    %v726 = vxor.u32 %v704, 2147483648
    %v727 = vmul.f32 %v726, 1.442695
    %v728 = vpow.pop %v727
    %v729 = vadd.f32 %v728, 1.0
    %v730 = vrcp.pop %v729
    %v731 = vmul.f32 %v729, %v730
    %v732 = vsub.f32 1.0, %v731
    %v733 = vmul.f32 %v730, %v732
    %v734 = vadd.f32 %v730, %v733
    %vm735 = vweird.f32 %v729
    %vm736 = vweird.f32 %v730
    %vm737 = vmor %vm735, %vm736
    %v738 = vsel %vm737, %v730, %v734
    %v739 = vand.u32 2147483647, %v729
    %vm740 = vcmp.eq.f32.partialorder %v739, 8.507059e+37
    %v741 = vand.u32 %v729, 2147483648
    %v742 = vor.u32 1.1754944e-38, %v741
    %v743 = vsel %vm740, %v742, %v738
    %v744 = vmul.f32 1.0, %v743
    %v745 = vtanh.pop %v705
    %v746 = vxor.u32 %v706, 2147483648
    %v747 = vmul.f32 %v746, 1.442695
    %v748 = vpow.pop %v747
    %v749 = vadd.f32 %v748, 1.0
    %v750 = vrcp.pop %v749
    %v751 = vmul.f32 %v749, %v750
    %v752 = vsub.f32 1.0, %v751
    %v753 = vmul.f32 %v750, %v752
    %v754 = vadd.f32 %v750, %v753
    %vm755 = vweird.f32 %v749
    %vm756 = vweird.f32 %v750
    %vm757 = vmor %vm755, %vm756
    %v758 = vsel %vm757, %v750, %v754
    %v759 = vand.u32 2147483647, %v749
    %vm760 = vcmp.eq.f32.partialorder %v759, 8.507059e+37
    %v761 = vand.u32 %v749, 2147483648
    %v762 = vor.u32 1.1754944e-38, %v761
    %v763 = vsel %vm760, %v762, %v758
    %v764 = vmul.f32 1.0, %v763
    %v765 = vmul.f32 %v744, %v44
    %v766 = vmul.f32 %v725, %v745
    %v767 = vadd.f32 %v765, %v766
    %v768 = vtanh.pop %v767
    %v769 = vmul.f32 %v764, %v768
    %v770 = vld [vmem:[%s6] sm:$0xff]
    %v771 = vld [vmem:[%s6 + $0x8] sm:$0xff]
    %v772 = vld [vmem:[%s6 + $0x10] sm:$0xff]
    %v773 = vld [vmem:[%s6 + $0x18] sm:$0xff]
    %v774 = vld [vmem:[%s6 + $0x20] sm:$0xff]
    %v775 = vld [vmem:[%s6 + $0x28] sm:$0xff]
    %v776 = vld [vmem:[%s6 + $0x30] sm:$0xff]
    %v777 = vld [vmem:[%s6 + $0x38] sm:$0xff]
    %v778 = vld [vmem:[%s6 + $0x40] sm:$0xff]
    %v779 = vld [vmem:[%s6 + $0x48] sm:$0xff]
    %v780 = vld [vmem:[%s6 + $0x50] sm:$0xff]
    %v781 = vld [vmem:[%s6 + $0x58] sm:$0xff]
    %v782 = vld [vmem:[%s6 + $0x60] sm:$0xff]
    %v783 = vld [vmem:[%s6 + $0x68] sm:$0xff]
    %v784 = vld [vmem:[%s6 + $0x70] sm:$0xff]
    %v785 = vld [vmem:[%s6 + $0x78] sm:$0xff]
    %786 = vmatpush.msra.mxu0 %v785
    %787 = vmatpush.msra.mxu0 %v784
    %788 = vmatpush.msra.mxu0 %v783
    %789 = vmatpush.msra.mxu0 %v782
    %790 = vmatpush.msra.mxu0 %v781
    %791 = vmatpush.msra.mxu0 %v780
    %792 = vmatpush.msra.mxu0 %v779
    %793 = vmatpush.msra.mxu0 %v778
    %794 = vmatpush.msra.mxu0 %v777
    %795 = vmatpush.msra.mxu0 %v776
    %796 = vmatpush.msra.mxu0 %v775
    %797 = vmatpush.msra.mxu0 %v774
    %798 = vmatpush.msra.mxu0 %v773
    %799 = vmatpush.msra.mxu0 %v772
    %800 = vmatpush.msra.mxu0 %v771
    %801 = vmatpush.msra.mxu0 %v770
    %802 = vmatmul.f32.gmra.mxu0 %v769
    %v803 = vpop.f32.mrf.mxu0
    %v804 = vadd.f32 %v38, %v803
    %805 = vdwg.mxu0
    %v806 = vxor.u32 %v804, 2147483648
    %v807 = vmul.f32 %v806, 1.442695
    %v808 = vpow.pop %v807
    %v809 = vadd.f32 %v808, 1.0
    %v810 = vrcp.pop %v809
    %v811 = vmul.f32 %v809, %v810
    %v812 = vsub.f32 1.0, %v811
    %v813 = vmul.f32 %v810, %v812
    %v814 = vadd.f32 %v810, %v813
    %vm815 = vweird.f32 %v809
    %vm816 = vweird.f32 %v810
    %vm817 = vmor %vm815, %vm816
    %v818 = vsel %vm817, %v810, %v814
    %v819 = vand.u32 2147483647, %v809
    %vm820 = vcmp.eq.f32.partialorder %v819, 8.507059e+37
    %v821 = vand.u32 %v809, 2147483648
    %v822 = vor.u32 1.1754944e-38, %v821
    %v823 = vsel %vm820, %v822, %v818
    %v824 = vmul.f32 1.0, %v823
    %vm825 = vcmp.eq.s32.totalorder %v40, 0
    %vm826 = vcmp.lt.s32.totalorder %v40, 2
    %v827 = vsel %vm826, %v824, 0.0
    %v828 = vsel %vm825, %v804, %v827
    %829 = vst [vmem:[#allocation3] sm:$0x1] %v828
    %v831 = vrot.slane %v769, 7
    %v834 = vrot.slane %v547, 6
    %v837 = vrot.slane %v767, 5
    %vm839 = vcmask 1040384
    %v840 = vsel %vm839, %v549, %v831
    %vm841 = vcmask 1041408
    %v842 = vsel %vm841, %v840, %v834
    %vm843 = vcmask 1042432
    %v844 = vsel %vm843, %v842, %v837
    %845 = vst [vmem:[#allocation2] sm:$0xf] %v844
    // Predicated region
    $region34: #{mimicnet_lstm_sequence.1} parent=1 // pred_check
      %p846 = pneg %p29
    $region35: #{mimicnet_lstm_sequence.1} parent=1 // pred_check_branch
      %848 = sbr.rel (%p846) target = $region37
    $region36: #{mimicnet_lstm_sequence.1} parent=1 // pred_region
      %v849 = vld [vmem:[#allocation2] sm:$0xf]
      %850 = vst [vmem:[%s8] sm:$0xf] %v849
    $region37: #{mimicnet_lstm_sequence.1} parent=1 // pred_fallthru
      _
    // Predicated region
    $region38: #{mimicnet_lstm_sequence.1} parent=1 // pred_check
      _
    $region39: #{mimicnet_lstm_sequence.1} parent=1 // pred_check_branch
      %852 = sbr.rel (0) target = $region41
    $region40: #{mimicnet_lstm_sequence.1} parent=1 // pred_region
      %854 = vsyncadd [#allocation4], 0
      %s856 = sshll.u32 [#allocation3], 4
      %s857 = int_to_ptr.vmem [resolvable:$true] %s856
      %s858 = sshll.u32 %s7, 4
      %s859 = int_to_ptr.hbm [resolvable:$true] %s858
      %861 = dma.vmem_to_hbm [thread:$0]  %s857, 16, %s859, [#allocation4]
    $region41: #{mimicnet_lstm_sequence.1} parent=1 // pred_fallthru
      _
    // Predicated region
    $region42: #{mimicnet_lstm_sequence.1} parent=1 // pred_check
      _
    $region43: #{mimicnet_lstm_sequence.1} parent=1 // pred_check_branch
      %863 = sbr.rel (0) target = $region45
    $region44: #{mimicnet_lstm_sequence.1} parent=1 // pred_region
      _
    $region45: #{mimicnet_lstm_sequence.1} parent=1 // pred_fallthru
      _
    // Predicated region
    $region46: #{mimicnet_lstm_sequence.1} parent=1 // pred_check
      _
    $region47: #{mimicnet_lstm_sequence.1} parent=1 // pred_check_branch
      %865 = sbr.rel (0) target = $region49
    $region48: #{mimicnet_lstm_sequence.1} parent=1 // pred_region
      %867 = dma.done [#allocation4], 16
    $region49: #{mimicnet_lstm_sequence.1} parent=1 // pred_fallthru
      _
    // Predicated region
    $region50: #{mimicnet_lstm_sequence.1} parent=1 // pred_check
      _
    $region51: #{mimicnet_lstm_sequence.1} parent=1 // pred_check_branch
      %869 = sbr.rel (0) target = $region53
    $region52: #{mimicnet_lstm_sequence.1} parent=1 // pred_region
      _
    $region53: #{mimicnet_lstm_sequence.1} parent=1 // pred_fallthru
      _
    %870 = vsyncpa [#allocation4], 1

</llo_original>
